<compile_context>
chip_gen: v5e
topology: v5e:2x2
jax: 0.10.0
libtpu: 0.0.40
codegen_flags: <defaults>
</compile_context>

<pallas_src>
import jax
import jax.numpy as jnp
from jax.experimental import pallas as pl
from jax.experimental.pallas import tpu as pltpu


def _round_up(x, m):
    return (x + m - 1) // m * m


def _gpcm_kernel(theta_ref, at_ref, thr_ref, out_ref):
    # theta_ref: [TILE_N, D_pad]      streamed person tile
    # at_ref:    [D_pad, I_pad]       resident, pre-transposed discriminations
    # thr_ref:   [C, I_pad]           resident cumulative thresholds
    # out_ref:   [C, TILE_N, I_pad]   lane-dense probabilities (category-major)
    score = jnp.dot(theta_ref[...], at_ref[...],
                    preferred_element_type=jnp.float32)        # MXU -> [TILE_N, I_pad]
    thr = thr_ref[...]                                          # [C, I_pad]
    n_cat = out_ref.shape[0]

    # s_c = c * score - threshold_c  (unrolled over the small static C;
    # all element-wise, stays in vregs).
    s = [jnp.float32(c) * score - thr[c:c + 1, :] for c in range(n_cat)]

    # Numerically-stable softmax over the category axis.
    m = s[0]
    for c in range(1, n_cat):
        m = jnp.maximum(m, s[c])
    e = [jnp.exp(sc - m) for sc in s]                           # EUP
    denom = e[0]
    for c in range(1, n_cat):
        denom = denom + e[c]
    inv = 1.0 / denom
    for c in range(n_cat):
        out_ref[c, :, :] = e[c] * inv                           # full-lane vst


def gpcm_forward(theta, a, b, *, tile_n=512):
    """GPCM forward.  theta: [N, D], a: [I, D], b: [I, C-1] -> probs [N, I, C]."""
    theta = theta if theta.dtype == jnp.float32 else theta.astype(jnp.float32)
    a = a if a.dtype == jnp.float32 else a.astype(jnp.float32)
    b = b if b.dtype == jnp.float32 else b.astype(jnp.float32)

    n, d = theta.shape
    n_items, d2 = a.shape
    assert d == d2, "theta / a latent-dim mismatch"
    n_cat = b.shape[1] + 1

    # Cumulative category thresholds [I, C]; tiny parameter prep done once in
    # the wrapper so the kernel contains no cross-lane cumsum.
    thr = jnp.concatenate(
        [jnp.zeros((n_items, 1), jnp.float32), jnp.cumsum(b, axis=1)], axis=1)

    # TPU-friendly padding: lane dims -> multiples of 128, row tile -> mult. of 8.
    d_pad = _round_up(d, 128)
    i_pad = _round_up(n_items, 128)
    tile_n = min(tile_n, _round_up(n, 8))
    n_pad = _round_up(n, tile_n)

    theta_p = theta
    if (n_pad, d_pad) != (n, d):
        theta_p = jnp.pad(theta, ((0, n_pad - n), (0, d_pad - d)))
    a_t = a.T                                                    # [D, I]: MXU-native rhs
    if (d_pad, i_pad) != (d, n_items):
        a_t = jnp.pad(a_t, ((0, d_pad - d), (0, i_pad - n_items)))
    thr_p = thr.T                                                # [C, I]
    if i_pad != n_items:
        thr_p = jnp.pad(thr_p, ((0, 0), (0, i_pad - n_items)))

    grid = (n_pad // tile_n,)

    out = pl.pallas_call(
        _gpcm_kernel,
        out_shape=jax.ShapeDtypeStruct((n_cat, n_pad, i_pad), jnp.float32),
        grid=grid,
        in_specs=[
            pl.BlockSpec((tile_n, d_pad), lambda gi: (gi, 0)),   # streamed theta
            pl.BlockSpec((d_pad, i_pad), lambda gi: (0, 0)),     # resident a^T
            pl.BlockSpec((n_cat, i_pad), lambda gi: (0, 0)),     # resident thresholds
        ],
        out_specs=pl.BlockSpec((n_cat, tile_n, i_pad), lambda gi: (0, gi, 0)),
        compiler_params=pltpu.CompilerParams(
            dimension_semantics=("parallel",)),
    )(theta_p, a_t, thr_p)

    # [C, N_pad, I_pad] -> [N, I, C] (layout plumbing outside the kernel).
    return jnp.transpose(out, (1, 2, 0))[:n, :n_items, :]


if __name__ == "__main__":
    # Small shapes consistent with the module: theta [n_persons, n_dims],
    # a [n_items, n_dims], b [n_items, n_categories-1].
    n_persons, n_dims, n_items, n_categories = 8, 32, 16, 4

    key = jax.random.PRNGKey(0)
    k_theta, k_a, k_b = jax.random.split(key, 3)
    theta = jax.random.normal(k_theta, (n_persons, n_dims), dtype=jnp.float32)
    # Perturb the module's init (ones / zeros) so the threshold / cumsum path
    # is actually exercised by the numerical check.
    a_param = jnp.ones((n_items, n_dims), jnp.float32) \
        + 0.1 * jax.random.normal(k_a, (n_items, n_dims), dtype=jnp.float32)
    b_param = 0.1 * jax.random.normal(
        k_b, (n_items, n_categories - 1), dtype=jnp.float32)

    probs = gpcm_forward(theta, a_param, b_param)
    probs = jax.block_until_ready(probs)

    # Pure-JAX reference with identical GPCM semantics.
    score = theta @ a_param.T
    thr = jnp.concatenate(
        [jnp.zeros((n_items, 1), jnp.float32), jnp.cumsum(b_param, axis=1)],
        axis=1)
    c_arr = jnp.arange(n_categories, dtype=jnp.float32)
    s = c_arr[None, None, :] * score[:, :, None] - thr[None, :, :]
    ref = jax.nn.softmax(s, axis=2)

    assert probs.shape == (n_persons, n_items, n_categories)
    assert jnp.allclose(probs, ref, atol=1e-5), "mismatch vs reference"
    assert jnp.allclose(probs.sum(-1), 1.0, atol=1e-5), "probs do not sum to 1"

    print("KERNEL_OK")
</pallas_src>

<mosaic_0001>
module attributes {stable_mosaic.version = 11 : i64} {
  func.func @_gpcm_kernel(%arg0: i32, %arg1: memref<8x128xf32, #tpu.memory_space<vmem>>, %arg2: memref<128x128xf32, #tpu.memory_space<vmem>>, %arg3: memref<4x128xf32, #tpu.memory_space<vmem>>, %arg4: memref<4x8x128xf32, #tpu.memory_space<vmem>>) attributes {dimension_semantics = [#tpu.dimension_semantics<parallel>], iteration_bounds = array<i64: 1>, scalar_prefetch = 0 : i64, scratch_operands = 0 : i64, tpu.core_type = #tpu.core_type<tc>, window_params = [{transform_indices = @transform_0, window_bounds = array<i64: 8, 128>}, {pipeline_mode = #tpu.pipeline_mode<synchronous>, transform_indices = @transform_1, window_bounds = array<i64: 128, 128>}, {pipeline_mode = #tpu.pipeline_mode<synchronous>, transform_indices = @transform_2, window_bounds = array<i64: 4, 128>}, {transform_indices = @transform_3, window_bounds = array<i64: 4, 8, 128>}]} {
    %c0 = arith.constant 0 : index
    %c0_0 = arith.constant 0 : index
    %0 = vector.load %arg1[%c0, %c0_0] : memref<8x128xf32, #tpu.memory_space<vmem>>, vector<8x128xf32>
    %c0_1 = arith.constant 0 : index
    %c0_2 = arith.constant 0 : index
    %1 = vector.load %arg2[%c0_1, %c0_2] : memref<128x128xf32, #tpu.memory_space<vmem>>, vector<128x128xf32>
    %cst = arith.constant dense<0.000000e+00> : vector<8x128xf32>
    %2 = tpu.matmul %0, %1, %cst {dimension_numbers = #tpu.dot_dimension_numbers<[1], [0], [0], [1], [0, 0, 1, 1], [], []>} : vector<8x128xf32>, vector<128x128xf32>, vector<8x128xf32> -> vector<8x128xf32>
    %c0_3 = arith.constant 0 : index
    %c0_4 = arith.constant 0 : index
    %3 = vector.load %arg3[%c0_3, %c0_4] : memref<4x128xf32, #tpu.memory_space<vmem>>, vector<4x128xf32>
    %cst_5 = arith.constant 0.000000e+00 : f32
    %4 = vector.broadcast %cst_5 : f32 to vector<8x128xf32>
    %5 = arith.mulf %4, %2 : vector<8x128xf32>
    %6 = vector.extract_strided_slice %3 {offsets = [0, 0], sizes = [1, 128], strides = [1, 1]} : vector<4x128xf32> to vector<1x128xf32>
    %7 = vector.broadcast %6 : vector<1x128xf32> to vector<8x128xf32>
    %8 = arith.subf %5, %7 : vector<8x128xf32>
    %cst_6 = arith.constant 1.000000e+00 : f32
    %9 = vector.broadcast %cst_6 : f32 to vector<8x128xf32>
    %10 = arith.mulf %9, %2 : vector<8x128xf32>
    %11 = vector.extract_strided_slice %3 {offsets = [1, 0], sizes = [1, 128], strides = [1, 1]} : vector<4x128xf32> to vector<1x128xf32>
    %12 = vector.broadcast %11 : vector<1x128xf32> to vector<8x128xf32>
    %13 = arith.subf %10, %12 : vector<8x128xf32>
    %cst_7 = arith.constant 2.000000e+00 : f32
    %14 = vector.broadcast %cst_7 : f32 to vector<8x128xf32>
    %15 = arith.mulf %14, %2 : vector<8x128xf32>
    %16 = vector.extract_strided_slice %3 {offsets = [2, 0], sizes = [1, 128], strides = [1, 1]} : vector<4x128xf32> to vector<1x128xf32>
    %17 = vector.broadcast %16 : vector<1x128xf32> to vector<8x128xf32>
    %18 = arith.subf %15, %17 : vector<8x128xf32>
    %cst_8 = arith.constant 3.000000e+00 : f32
    %19 = vector.broadcast %cst_8 : f32 to vector<8x128xf32>
    %20 = arith.mulf %19, %2 : vector<8x128xf32>
    %21 = vector.extract_strided_slice %3 {offsets = [3, 0], sizes = [1, 128], strides = [1, 1]} : vector<4x128xf32> to vector<1x128xf32>
    %22 = vector.broadcast %21 : vector<1x128xf32> to vector<8x128xf32>
    %23 = arith.subf %20, %22 : vector<8x128xf32>
    %24 = arith.maximumf %8, %13 : vector<8x128xf32>
    %25 = arith.maximumf %24, %18 : vector<8x128xf32>
    %26 = arith.maximumf %25, %23 : vector<8x128xf32>
    %27 = arith.subf %8, %26 : vector<8x128xf32>
    %28 = math.exp %27 : vector<8x128xf32>
    %29 = arith.subf %13, %26 : vector<8x128xf32>
    %30 = math.exp %29 : vector<8x128xf32>
    %31 = arith.subf %18, %26 : vector<8x128xf32>
    %32 = math.exp %31 : vector<8x128xf32>
    %33 = arith.subf %23, %26 : vector<8x128xf32>
    %34 = math.exp %33 : vector<8x128xf32>
    %35 = arith.addf %28, %30 : vector<8x128xf32>
    %36 = arith.addf %35, %32 : vector<8x128xf32>
    %37 = arith.addf %36, %34 : vector<8x128xf32>
    %cst_9 = arith.constant 1.000000e+00 : f32
    %38 = vector.broadcast %cst_9 : f32 to vector<8x128xf32>
    %39 = arith.divf %38, %37 : vector<8x128xf32>
    %40 = arith.mulf %28, %39 : vector<8x128xf32>
    %c0_10 = arith.constant 0 : index
    %c0_11 = arith.constant 0 : index
    %c0_12 = arith.constant 0 : index
    %41 = vector.load %arg4[%c0_10, %c0_11, %c0_12] : memref<4x8x128xf32, #tpu.memory_space<vmem>>, vector<1x8x128xf32>
    %42 = vector.shape_cast %41 : vector<1x8x128xf32> to vector<8x128xf32>
    %43 = vector.shape_cast %40 : vector<8x128xf32> to vector<1x8x128xf32>
    tpu.vector_store %arg4[%c0_10, %c0_11, %c0_12], %43 {strides = array<i32>} : memref<4x8x128xf32, #tpu.memory_space<vmem>>, vector<1x8x128xf32>,
    %44 = arith.mulf %30, %39 : vector<8x128xf32>
    %c1 = arith.constant 1 : index
    %c0_13 = arith.constant 0 : index
    %c0_14 = arith.constant 0 : index
    %45 = vector.load %arg4[%c1, %c0_13, %c0_14] : memref<4x8x128xf32, #tpu.memory_space<vmem>>, vector<1x8x128xf32>
    %46 = vector.shape_cast %45 : vector<1x8x128xf32> to vector<8x128xf32>
    %47 = vector.shape_cast %44 : vector<8x128xf32> to vector<1x8x128xf32>
    tpu.vector_store %arg4[%c1, %c0_13, %c0_14], %47 {strides = array<i32>} : memref<4x8x128xf32, #tpu.memory_space<vmem>>, vector<1x8x128xf32>,
    %48 = arith.mulf %32, %39 : vector<8x128xf32>
    %c2 = arith.constant 2 : index
    %c0_15 = arith.constant 0 : index
    %c0_16 = arith.constant 0 : index
    %49 = vector.load %arg4[%c2, %c0_15, %c0_16] : memref<4x8x128xf32, #tpu.memory_space<vmem>>, vector<1x8x128xf32>
    %50 = vector.shape_cast %49 : vector<1x8x128xf32> to vector<8x128xf32>
    %51 = vector.shape_cast %48 : vector<8x128xf32> to vector<1x8x128xf32>
    tpu.vector_store %arg4[%c2, %c0_15, %c0_16], %51 {strides = array<i32>} : memref<4x8x128xf32, #tpu.memory_space<vmem>>, vector<1x8x128xf32>,
    %52 = arith.mulf %34, %39 : vector<8x128xf32>
    %c3 = arith.constant 3 : index
    %c0_17 = arith.constant 0 : index
    %c0_18 = arith.constant 0 : index
    %53 = vector.load %arg4[%c3, %c0_17, %c0_18] : memref<4x8x128xf32, #tpu.memory_space<vmem>>, vector<1x8x128xf32>
    %54 = vector.shape_cast %53 : vector<1x8x128xf32> to vector<8x128xf32>
    %55 = vector.shape_cast %52 : vector<8x128xf32> to vector<1x8x128xf32>
    tpu.vector_store %arg4[%c3, %c0_17, %c0_18], %55 {strides = array<i32>} : memref<4x8x128xf32, #tpu.memory_space<vmem>>, vector<1x8x128xf32>,
    return
  }
  func.func @transform_0(%arg0: i32) -> (i32, i32) {
    %c0_i32 = arith.constant 0 : i32
    %c0_i32_0 = arith.constant 0 : i32
    return %arg0, %c0_i32 : i32, i32
  }
  func.func @transform_1(%arg0: i32) -> (i32, i32) {
    %c0_i32 = arith.constant 0 : i32
    %c0_i32_0 = arith.constant 0 : i32
    %c0_i32_1 = arith.constant 0 : i32
    return %c0_i32, %c0_i32_0 : i32, i32
  }
  func.func @transform_2(%arg0: i32) -> (i32, i32) {
    %c0_i32 = arith.constant 0 : i32
    %c0_i32_0 = arith.constant 0 : i32
    %c0_i32_1 = arith.constant 0 : i32
    return %c0_i32, %c0_i32_0 : i32, i32
  }
  func.func @transform_3(%arg0: i32) -> (i32, i32, i32) {
    %c0_i32 = arith.constant 0 : i32
    %c0_i32_0 = arith.constant 0 : i32
    %c0_i32_1 = arith.constant 0 : i32
    return %c0_i32, %arg0, %c0_i32_0 : i32, i32, i32
  }
}

</mosaic_0001>

<llo_original>
// kernel: tpu_custom_call.1
$region0: #{tpu_custom_call.1}
  #allocation0 [shape = 'u32[]', space=smem, size = 0x4, offset = 0x4, fixed_abs, tag = 'smem constant byte address 0x4 - core index']
  #allocation1 [shape = 'u32[72,128]{1,0:T(1,128)}', space=vmem, size = 0x9000, scoped, tag = 'internal scratch']
  %s0 = inlined_call_operand.hbm [shape: f32[8,128], index: 0, kind: input, shape index: {}]
  %s1 = inlined_call_operand.hbm [shape: f32[128,128], index: 1, kind: input, shape index: {}]
  %s2 = inlined_call_operand.hbm [shape: f32[4,128], index: 2, kind: input, shape index: {}]
  %s3 = inlined_call_operand.hbm [shape: f32[4,8,128], index: 3, kind: output, shape index: {}]
  %s4 = sld [smem:[#allocation0]]
  $region34: #{tpu_custom_call.1} parent=0
    _
  %s6 = ssub.s32 1, %s4
  %s7 = scalar_select 0, %s6, %s4
  $region1: #{tpu_custom_call.1} parent=0
    #allocation2 [shape = 'u8[4096]{0}', space=vmem, size = 0x1000, scoped, tag = 'input window, operand 0, single buffered']
    #allocation3 [shape = 's32[1]{0}', space=sflag, size = 0x4, scoped, tag = 'scoped memory for tpu_custom_call.1']
    #allocation4 [shape = 's32[1]{0}', space=sflag, size = 0x4, scoped, tag = 'scoped memory for tpu_custom_call.1']
    #allocation5 [shape = 'u8[65536]{0}', space=vmem, size = 0x10000, scoped, tag = 'input window, operand 1, single buffered']
    #allocation6 [shape = 's32[1]{0}', space=sflag, size = 0x4, scoped, tag = 'scoped memory for tpu_custom_call.1']
    #allocation7 [shape = 'u8[2048]{0}', space=vmem, size = 0x800, scoped, tag = 'input window, operand 2, single buffered']
    #allocation8 [shape = 'u8[16384]{0}', space=vmem, size = 0x4000, scoped, tag = 'output window, operand 0, single buffered']
    %8 = vsyncpa [#allocation3], 0
    %9 = vsyncpa [#allocation6], 0
    %10 = vsyncpa [#allocation4], 0
    // Predicated region
    $region2: #{tpu_custom_call.1} parent=1 // pred_check
      _
    $region3: #{tpu_custom_call.1} parent=1 // pred_check_branch
      %12 = sbr.rel (0) target = $region5
    $region4: #{tpu_custom_call.1} parent=1 // pred_region
      %14 = vsyncadd [#allocation3], 0
      %s16 = sshll.u32 %s0, 4
      %s17 = int_to_ptr.hbm [resolvable:$true] %s16
      %s18 = sshll.u32 [#allocation2], 4
      %s19 = int_to_ptr.vmem [resolvable:$true] %s18
      %21 = dma.hbm_to_vmem [thread:$0]  %s17, 128, %s19, [#allocation3]
    $region5: #{tpu_custom_call.1} parent=1 // pred_fallthru
      _
    // Predicated region
    $region6: #{tpu_custom_call.1} parent=1 // pred_check
      _
    $region7: #{tpu_custom_call.1} parent=1 // pred_check_branch
      %23 = sbr.rel (0) target = $region9
    $region8: #{tpu_custom_call.1} parent=1 // pred_region
      %25 = vsyncadd [#allocation6], 0
      %s26 = sshll.u32 %s1, 4
      %s27 = int_to_ptr.hbm [resolvable:$true] %s26
      %s28 = sshll.u32 [#allocation5], 4
      %s29 = int_to_ptr.vmem [resolvable:$true] %s28
      %34 = dma.hbm_to_vmem [thread:$0]  %s27, 2048, %s29, [#allocation6], 128, 128, 8
    $region9: #{tpu_custom_call.1} parent=1 // pred_fallthru
      _
    // Predicated region
    $region10: #{tpu_custom_call.1} parent=1 // pred_check
      _
    $region11: #{tpu_custom_call.1} parent=1 // pred_check_branch
      %36 = sbr.rel (0) target = $region13
    $region12: #{tpu_custom_call.1} parent=1 // pred_region
      %38 = vsyncadd [#allocation6], 0
      %s40 = sshll.u32 %s2, 4
      %s41 = int_to_ptr.hbm [resolvable:$true] %s40
      %s42 = sshll.u32 [#allocation7], 4
      %s43 = int_to_ptr.vmem [resolvable:$true] %s42
      %45 = dma.hbm_to_vmem [thread:$0]  %s41, 64, %s43, [#allocation6]
    $region13: #{tpu_custom_call.1} parent=1 // pred_fallthru
      _
    // Predicated region
    $region14: #{tpu_custom_call.1} parent=1 // pred_check
      _
    $region15: #{tpu_custom_call.1} parent=1 // pred_check_branch
      %47 = sbr.rel (0) target = $region17
    $region16: #{tpu_custom_call.1} parent=1 // pred_region
      %49 = dma.done [#allocation3], 128
    $region17: #{tpu_custom_call.1} parent=1 // pred_fallthru
      _
    // Predicated region
    $region18: #{tpu_custom_call.1} parent=1 // pred_check
      _
    $region19: #{tpu_custom_call.1} parent=1 // pred_check_branch
      %51 = sbr.rel (0) target = $region21
    $region20: #{tpu_custom_call.1} parent=1 // pred_region
      %53 = dma.done [#allocation6], 2048
    $region21: #{tpu_custom_call.1} parent=1 // pred_fallthru
      _
    // Predicated region
    $region22: #{tpu_custom_call.1} parent=1 // pred_check
      _
    $region23: #{tpu_custom_call.1} parent=1 // pred_check_branch
      %55 = sbr.rel (0) target = $region25
    $region24: #{tpu_custom_call.1} parent=1 // pred_region
      %57 = dma.done [#allocation6], 64
    $region25: #{tpu_custom_call.1} parent=1 // pred_fallthru
      _
    %v58 = vld [vmem:[#allocation2] sm:$0xff]
    %v59 = vld [vmem:[#allocation5] sm:$0xff]
    %v60 = vld [vmem:[#allocation5 + $0x8] sm:$0xff]
    %v61 = vld [vmem:[#allocation5 + $0x10] sm:$0xff]
    %v62 = vld [vmem:[#allocation5 + $0x18] sm:$0xff]
    %v63 = vld [vmem:[#allocation5 + $0x20] sm:$0xff]
    %v64 = vld [vmem:[#allocation5 + $0x28] sm:$0xff]
    %v65 = vld [vmem:[#allocation5 + $0x30] sm:$0xff]
    %v66 = vld [vmem:[#allocation5 + $0x38] sm:$0xff]
    %v67 = vld [vmem:[#allocation5 + $0x40] sm:$0xff]
    %v68 = vld [vmem:[#allocation5 + $0x48] sm:$0xff]
    %v69 = vld [vmem:[#allocation5 + $0x50] sm:$0xff]
    %v70 = vld [vmem:[#allocation5 + $0x58] sm:$0xff]
    %v71 = vld [vmem:[#allocation5 + $0x60] sm:$0xff]
    %v72 = vld [vmem:[#allocation5 + $0x68] sm:$0xff]
    %v73 = vld [vmem:[#allocation5 + $0x70] sm:$0xff]
    %v74 = vld [vmem:[#allocation5 + $0x78] sm:$0xff]
    %75 = vmatpush.msra.mxu0 %v74
    %76 = vmatpush.msra.mxu0 %v73
    %77 = vmatpush.msra.mxu0 %v72
    %78 = vmatpush.msra.mxu0 %v71
    %79 = vmatpush.msra.mxu0 %v70
    %80 = vmatpush.msra.mxu0 %v69
    %81 = vmatpush.msra.mxu0 %v68
    %82 = vmatpush.msra.mxu0 %v67
    %83 = vmatpush.msra.mxu0 %v66
    %84 = vmatpush.msra.mxu0 %v65
    %85 = vmatpush.msra.mxu0 %v64
    %86 = vmatpush.msra.mxu0 %v63
    %87 = vmatpush.msra.mxu0 %v62
    %88 = vmatpush.msra.mxu0 %v61
    %89 = vmatpush.msra.mxu0 %v60
    %90 = vmatpush.msra.mxu0 %v59
    %91 = vmatmul.f32.gmra.mxu0 %v58
    %v92 = vpop.f32.mrf.mxu0
    %v93 = vadd.f32 0.0, %v92
    %94 = vdwg.mxu0
    %v95 = vld [vmem:[#allocation7] sm:$0xf]
    %v96 = vmul.f32 %v93, 0.0
    %v97 = vperm.slane %v95, 0
    %v98 = vsub.f32 %v96, %v97
    %v99 = vperm.slane %v95, 1
    %v100 = vsub.f32 %v93, %v99
    %v101 = vmul.f32 %v93, 2.0
    %v102 = vperm.slane %v95, 2
    %v103 = vsub.f32 %v101, %v102
    %v104 = vmul.f32 %v93, 3.0
    %v105 = vperm.slane %v95, 3
    %v106 = vsub.f32 %v104, %v105
    %v107 = vmax.f32 %v98, %v100
    %v108 = vmax.f32 %v107, %v103
    %v109 = vmax.f32 %v108, %v106
    %v110 = vsub.f32 %v98, %v109
    %v111 = vmul.f32 %v110, 1.442695
    %v112 = vpow.pop %v111
    %v113 = vsub.f32 %v100, %v109
    %v114 = vmul.f32 %v113, 1.442695
    %v115 = vpow.pop %v114
    %v116 = vsub.f32 %v103, %v109
    %v117 = vmul.f32 %v116, 1.442695
    %v118 = vpow.pop %v117
    %v119 = vsub.f32 %v106, %v109
    %v120 = vmul.f32 %v119, 1.442695
    %v121 = vpow.pop %v120
    %v122 = vadd.f32 %v112, %v115
    %v123 = vadd.f32 %v122, %v118
    %v124 = vadd.f32 %v123, %v121
    %v125 = vrcp.pop %v124
    %v126 = vmul.f32 %v124, %v125
    %v127 = vsub.f32 1.0, %v126
    %v128 = vmul.f32 %v125, %v127
    %v129 = vadd.f32 %v125, %v128
    %vm130 = vweird.f32 %v124
    %vm131 = vweird.f32 %v125
    %vm132 = vmor %vm130, %vm131
    %v133 = vsel %vm132, %v125, %v129
    %v134 = vand.u32 2147483647, %v124
    %vm135 = vcmp.eq.f32.partialorder %v134, 8.507059e+37
    %v136 = vand.u32 %v124, 2147483648
    %v137 = vor.u32 1.1754944e-38, %v136
    %v138 = vsel %vm135, %v137, %v133
    %v139 = vmul.f32 1.0, %v138
    %v140 = vmul.f32 %v112, %v139
    %141 = vst [vmem:[#allocation8] sm:$0xff] %v140
    %v142 = vmul.f32 %v115, %v139
    %s143 = scalar_lea.vmem [#allocation8], 8
    %144 = vst [vmem:[%s143] sm:$0xff] %v142
    %v145 = vmul.f32 %v118, %v139
    %s146 = scalar_lea.vmem [#allocation8], 16
    %147 = vst [vmem:[%s146] sm:$0xff] %v145
    %v148 = vmul.f32 %v121, %v139
    %s149 = scalar_lea.vmem [#allocation8], 24
    %150 = vst [vmem:[%s149] sm:$0xff] %v148
    // Predicated region
    $region26: #{tpu_custom_call.1} parent=1 // pred_check
      _
    $region27: #{tpu_custom_call.1} parent=1 // pred_check_branch
      %152 = sbr.rel (0) target = $region29
    $region28: #{tpu_custom_call.1} parent=1 // pred_region
      %154 = vsyncadd [#allocation4], 0
      %s155 = sshll.u32 [#allocation8], 4
      %s156 = int_to_ptr.vmem [resolvable:$true] %s155
      %s157 = sshll.u32 %s3, 4
      %s158 = int_to_ptr.hbm [resolvable:$true] %s157
      %163 = dma.vmem_to_hbm [thread:$0]  %s156, 512, %s158, [#allocation4], 128, 128, 8
    $region29: #{tpu_custom_call.1} parent=1 // pred_fallthru
      _
    // Predicated region
    $region30: #{tpu_custom_call.1} parent=1 // pred_check
      _
    $region31: #{tpu_custom_call.1} parent=1 // pred_check_branch
      %165 = sbr.rel (0) target = $region33
    $region32: #{tpu_custom_call.1} parent=1 // pred_region
      %167 = dma.done [#allocation4], 512
    $region33: #{tpu_custom_call.1} parent=1 // pred_fallthru
      _
    %168 = vsyncpa [#allocation3], 1
    %169 = vsyncpa [#allocation6], 1
    %170 = vsyncpa [#allocation4], 1

</llo_original>
